<compile_context>
chip_gen: v7x
topology: tpu7x:2x2x1
jax: 0.10.0
libtpu: 0.0.40
codegen_flags: <defaults>
</compile_context>

<pallas_src>
import jax
import jax.numpy as jnp
from jax.experimental import pallas as pl
from jax.experimental.pallas import tpu as pltpu


def _fused_kernel(x1_ref, x2_ref, w0a_ref, w0b_ref, b0_ref, w1_ref, b1_ref, o_ref):
    # layers[0]: multi-input Linear, expressed as two accumulated matmuls
    # (equivalent to concat([x1, x2]) @ w0) — all MXU work, no lane shuffle.
    h = jnp.dot(x1_ref[...], w0a_ref[...], preferred_element_type=jnp.float32)
    h = h + jnp.dot(x2_ref[...], w0b_ref[...], preferred_element_type=jnp.float32)
    h = h + b0_ref[...]
    # layers[1]: ReLU
    h = jnp.maximum(h, 0.0)
    # layers[2]: Linear
    out = jnp.dot(h.astype(w1_ref.dtype), w1_ref[...],
                  preferred_element_type=jnp.float32) + b1_ref[...]
    o_ref[...] = out.astype(o_ref.dtype)


def _round_up(x, m):
    return (x + m - 1) // m * m


def multi_input_sequential(x1, x2, w0, b0, w1, b1, *, block_b=512):
    """Fused forward pass of MultiInputSequential(ConcatLinear, ReLU, Linear).

    x1: (B, D1), x2: (B, D2), w0: (D1+D2, H), b0: (H,) or (1, H),
    w1: (H, O), b1: (O,) or (1, O).  Returns (B, O) float32.
    """
    B, D1 = x1.shape
    D2 = x2.shape[1]
    H = w0.shape[1]
    O = w1.shape[1]

    # Split the first weight along the contraction dim -> no in-kernel concat.
    w0a = w0[:D1]
    w0b = w0[D1:]

    # Lane-dense padding (multiples of 128 on feature axes), sublane-aligned
    # batch tiling (multiple of 8).  Zero padding is exact: padded x columns
    # meet padded w rows (contribute 0), padded H columns of w0/b0 are 0 so
    # relu(0)=0 meets padded (zero) rows of w1, padded O columns are sliced off.
    D1p = _round_up(D1, 128)
    D2p = _round_up(D2, 128)
    Hp = _round_up(H, 128)
    Op = _round_up(O, 128)
    TB = min(block_b, _round_up(B, 8))     # batch tile (>=8, <=block_b rows)
    Bp = _round_up(B, TB)

    def pad2(a, rows, cols):
        a = a.reshape((-1, a.shape[-1])) if a.ndim == 2 else a.reshape((1, -1))
        return jnp.pad(a, ((0, rows - a.shape[0]), (0, cols - a.shape[1])))

    x1p = pad2(x1, Bp, D1p)
    x2p = pad2(x2, Bp, D2p)
    w0ap = pad2(w0a, D1p, Hp)
    w0bp = pad2(w0b, D2p, Hp)
    b0p = pad2(b0, 1, Hp)
    w1p = pad2(w1, Hp, Op)
    b1p = pad2(b1, 1, Op)

    grid = (Bp // TB,)

    out = pl.pallas_call(
        _fused_kernel,
        out_shape=jax.ShapeDtypeStruct((Bp, Op), jnp.float32),
        grid_spec=pltpu.PrefetchScalarGridSpec(
            num_scalar_prefetch=0,
            grid=grid,
            in_specs=[
                # Activations: tiled over batch, double-buffered by Pallas.
                pl.BlockSpec((TB, D1p), lambda i: (i, 0)),   # x1
                pl.BlockSpec((TB, D2p), lambda i: (i, 0)),   # x2
                # Weights / biases: constant index_map -> VMEM-resident.
                pl.BlockSpec((D1p, Hp), lambda i: (0, 0)),   # w0[:D1]
                pl.BlockSpec((D2p, Hp), lambda i: (0, 0)),   # w0[D1:]
                pl.BlockSpec((1, Hp), lambda i: (0, 0)),     # b0
                pl.BlockSpec((Hp, Op), lambda i: (0, 0)),    # w1
                pl.BlockSpec((1, Op), lambda i: (0, 0)),     # b1
            ],
            out_specs=pl.BlockSpec((TB, Op), lambda i: (i, 0)),
        ),
        compiler_params=pltpu.CompilerParams(
            dimension_semantics=("parallel",),
        ),
    )(x1p, x2p, w0ap, w0bp, b0p, w1p, b1p)

    return out[:B, :O]


def reference(x1, x2, w0, b0, w1, b1):
    x = jnp.concatenate([x1, x2], axis=-1)
    h = jnp.maximum(x @ w0 + b0.reshape(1, -1), 0.0)
    return h @ w1 + b1.reshape(1, -1)


if __name__ == "__main__":
    key = jax.random.PRNGKey(0)
    k1, k2, k3, k4, k5, k6 = jax.random.split(key, 6)

    # Small shapes consistent with the instantiated module.
    B, D1, D2, H, O = 8, 16, 16, 32, 32

    x1 = jax.random.normal(k1, (B, D1), dtype=jnp.float32)
    x2 = jax.random.normal(k2, (B, D2), dtype=jnp.float32)

    # Synthetic parameters (PyTorch layout would be (out, in); we store the
    # transpose (in, out) so the kernel computes x @ W directly).
    w0 = jax.random.normal(k3, (D1 + D2, H), dtype=jnp.float32) * 0.1
    b0 = jax.random.normal(k4, (H,), dtype=jnp.float32) * 0.1
    w1 = jax.random.normal(k5, (H, O), dtype=jnp.float32) * 0.1
    b1 = jax.random.normal(k6, (O,), dtype=jnp.float32) * 0.1

    out = multi_input_sequential(x1, x2, w0, b0, w1, b1)
    out = jax.block_until_ready(out)

    ref = reference(x1, x2, w0, b0, w1, b1)
    assert out.shape == (B, O)
    assert jnp.allclose(out, ref, atol=1e-5, rtol=1e-5)

    print("KERNEL_OK")
</pallas_src>

<mosaic_0001>
module attributes {stable_mosaic.version = 11 : i64} {
  func.func @_fused_kernel(%arg0: i32, %arg1: memref<8x128xf32, #tpu.memory_space<vmem>>, %arg2: memref<8x128xf32, #tpu.memory_space<vmem>>, %arg3: memref<128x128xf32, #tpu.memory_space<vmem>>, %arg4: memref<128x128xf32, #tpu.memory_space<vmem>>, %arg5: memref<1x128xf32, #tpu.memory_space<vmem>>, %arg6: memref<128x128xf32, #tpu.memory_space<vmem>>, %arg7: memref<1x128xf32, #tpu.memory_space<vmem>>, %arg8: memref<8x128xf32, #tpu.memory_space<vmem>>) attributes {dimension_semantics = [#tpu.dimension_semantics<parallel>], iteration_bounds = array<i64: 1>, scalar_prefetch = 0 : i64, scratch_operands = 0 : i64, tpu.core_type = #tpu.core_type<tc>, window_params = [{transform_indices = @transform_0, window_bounds = array<i64: 8, 128>}, {transform_indices = @transform_1, window_bounds = array<i64: 8, 128>}, {pipeline_mode = #tpu.pipeline_mode<synchronous>, transform_indices = @transform_2, window_bounds = array<i64: 128, 128>}, {pipeline_mode = #tpu.pipeline_mode<synchronous>, transform_indices = @transform_3, window_bounds = array<i64: 128, 128>}, {pipeline_mode = #tpu.pipeline_mode<synchronous>, transform_indices = @transform_4, window_bounds = array<i64: 1, 128>}, {pipeline_mode = #tpu.pipeline_mode<synchronous>, transform_indices = @transform_5, window_bounds = array<i64: 128, 128>}, {pipeline_mode = #tpu.pipeline_mode<synchronous>, transform_indices = @transform_6, window_bounds = array<i64: 1, 128>}, {transform_indices = @transform_7, window_bounds = array<i64: 8, 128>}]} {
    %c0 = arith.constant 0 : index
    %c0_0 = arith.constant 0 : index
    %0 = vector.load %arg1[%c0, %c0_0] : memref<8x128xf32, #tpu.memory_space<vmem>>, vector<8x128xf32>
    %c0_1 = arith.constant 0 : index
    %c0_2 = arith.constant 0 : index
    %1 = vector.load %arg3[%c0_1, %c0_2] : memref<128x128xf32, #tpu.memory_space<vmem>>, vector<128x128xf32>
    %cst = arith.constant dense<0.000000e+00> : vector<8x128xf32>
    %2 = tpu.matmul %0, %1, %cst {dimension_numbers = #tpu.dot_dimension_numbers<[1], [0], [0], [1], [0, 0, 1, 1], [], []>} : vector<8x128xf32>, vector<128x128xf32>, vector<8x128xf32> -> vector<8x128xf32>
    %c0_3 = arith.constant 0 : index
    %c0_4 = arith.constant 0 : index
    %3 = vector.load %arg2[%c0_3, %c0_4] : memref<8x128xf32, #tpu.memory_space<vmem>>, vector<8x128xf32>
    %c0_5 = arith.constant 0 : index
    %c0_6 = arith.constant 0 : index
    %4 = vector.load %arg4[%c0_5, %c0_6] : memref<128x128xf32, #tpu.memory_space<vmem>>, vector<128x128xf32>
    %cst_7 = arith.constant dense<0.000000e+00> : vector<8x128xf32>
    %5 = tpu.matmul %3, %4, %cst_7 {dimension_numbers = #tpu.dot_dimension_numbers<[1], [0], [0], [1], [0, 0, 1, 1], [], []>} : vector<8x128xf32>, vector<128x128xf32>, vector<8x128xf32> -> vector<8x128xf32>
    %6 = arith.addf %2, %5 : vector<8x128xf32>
    %c0_8 = arith.constant 0 : index
    %c0_9 = arith.constant 0 : index
    %7 = vector.load %arg5[%c0_8, %c0_9] : memref<1x128xf32, #tpu.memory_space<vmem>>, vector<1x128xf32>
    %8 = vector.broadcast %7 : vector<1x128xf32> to vector<8x128xf32>
    %9 = arith.addf %6, %8 : vector<8x128xf32>
    %cst_10 = arith.constant 0.000000e+00 : f32
    %10 = vector.broadcast %cst_10 : f32 to vector<8x128xf32>
    %11 = arith.maximumf %9, %10 : vector<8x128xf32>
    %c0_11 = arith.constant 0 : index
    %c0_12 = arith.constant 0 : index
    %12 = vector.load %arg6[%c0_11, %c0_12] : memref<128x128xf32, #tpu.memory_space<vmem>>, vector<128x128xf32>
    %cst_13 = arith.constant dense<0.000000e+00> : vector<8x128xf32>
    %13 = tpu.matmul %11, %12, %cst_13 {dimension_numbers = #tpu.dot_dimension_numbers<[1], [0], [0], [1], [0, 0, 1, 1], [], []>} : vector<8x128xf32>, vector<128x128xf32>, vector<8x128xf32> -> vector<8x128xf32>
    %c0_14 = arith.constant 0 : index
    %c0_15 = arith.constant 0 : index
    %14 = vector.load %arg7[%c0_14, %c0_15] : memref<1x128xf32, #tpu.memory_space<vmem>>, vector<1x128xf32>
    %15 = vector.broadcast %14 : vector<1x128xf32> to vector<8x128xf32>
    %16 = arith.addf %13, %15 : vector<8x128xf32>
    %c0_16 = arith.constant 0 : index
    %c0_17 = arith.constant 0 : index
    %17 = vector.load %arg8[%c0_16, %c0_17] : memref<8x128xf32, #tpu.memory_space<vmem>>, vector<8x128xf32>
    tpu.vector_store %arg8[%c0_16, %c0_17], %16 {strides = array<i32>} : memref<8x128xf32, #tpu.memory_space<vmem>>, vector<8x128xf32>,
    return
  }
  func.func @transform_0(%arg0: i32) -> (i32, i32) {
    %c0_i32 = arith.constant 0 : i32
    %c0_i32_0 = arith.constant 0 : i32
    return %arg0, %c0_i32 : i32, i32
  }
  func.func @transform_1(%arg0: i32) -> (i32, i32) {
    %c0_i32 = arith.constant 0 : i32
    %c0_i32_0 = arith.constant 0 : i32
    return %arg0, %c0_i32 : i32, i32
  }
  func.func @transform_2(%arg0: i32) -> (i32, i32) {
    %c0_i32 = arith.constant 0 : i32
    %c0_i32_0 = arith.constant 0 : i32
    %c0_i32_1 = arith.constant 0 : i32
    return %c0_i32, %c0_i32_0 : i32, i32
  }
  func.func @transform_3(%arg0: i32) -> (i32, i32) {
    %c0_i32 = arith.constant 0 : i32
    %c0_i32_0 = arith.constant 0 : i32
    %c0_i32_1 = arith.constant 0 : i32
    return %c0_i32, %c0_i32_0 : i32, i32
  }
  func.func @transform_4(%arg0: i32) -> (i32, i32) {
    %c0_i32 = arith.constant 0 : i32
    %c0_i32_0 = arith.constant 0 : i32
    %c0_i32_1 = arith.constant 0 : i32
    return %c0_i32, %c0_i32_0 : i32, i32
  }
  func.func @transform_5(%arg0: i32) -> (i32, i32) {
    %c0_i32 = arith.constant 0 : i32
    %c0_i32_0 = arith.constant 0 : i32
    %c0_i32_1 = arith.constant 0 : i32
    return %c0_i32, %c0_i32_0 : i32, i32
  }
  func.func @transform_6(%arg0: i32) -> (i32, i32) {
    %c0_i32 = arith.constant 0 : i32
    %c0_i32_0 = arith.constant 0 : i32
    %c0_i32_1 = arith.constant 0 : i32
    return %c0_i32, %c0_i32_0 : i32, i32
  }
  func.func @transform_7(%arg0: i32) -> (i32, i32) {
    %c0_i32 = arith.constant 0 : i32
    %c0_i32_0 = arith.constant 0 : i32
    return %arg0, %c0_i32 : i32, i32
  }
}

</mosaic_0001>

<llo_original>
// kernel: tpu_custom_call.1
$region0: #{tpu_custom_call.1}
  #allocation0 [shape = 'u32[]', space=smem, size = 0x4, offset = 0x4, fixed_abs, tag = 'smem constant byte address 0x4 - core index']
  #allocation1 [shape = 'u32[144,128]{1,0:T(1,128)}', space=vmem, size = 0x12000, scoped, tag = 'internal scratch']
  %s0 = inlined_call_operand.hbm [shape: f32[8,128], index: 0, kind: input, shape index: {}]
  %s1 = inlined_call_operand.hbm [shape: f32[8,128], index: 1, kind: input, shape index: {}]
  %s2 = inlined_call_operand.hbm [shape: f32[128,128], index: 2, kind: input, shape index: {}]
  %s3 = inlined_call_operand.hbm [shape: f32[128,128], index: 3, kind: input, shape index: {}]
  %s4 = inlined_call_operand.vmem [shape: f32[1,128], index: 4, kind: input, shape index: {}]
  %s5 = inlined_call_operand.hbm [shape: f32[128,128], index: 5, kind: input, shape index: {}]
  %s6 = inlined_call_operand.vmem [shape: f32[1,128], index: 6, kind: input, shape index: {}]
  %s7 = inlined_call_operand.hbm [shape: f32[8,128], index: 7, kind: output, shape index: {}]
  %s8 = sld [smem:[#allocation0]]
  $region58: #{tpu_custom_call.1} parent=0
    _
  %s10 = ssub.s32 1, %s8
  %s11 = scalar_select 0, %s10, %s8
  $region1: #{tpu_custom_call.1} parent=0
    #allocation2 [shape = 'u8[4096]{0}', space=vmem, size = 0x1000, scoped, tag = 'input window, operand 0, single buffered']
    #allocation3 [shape = 's32[1]{0}', space=sflag, size = 0x4, scoped, tag = 'scoped memory for tpu_custom_call.1']
    #allocation4 [shape = 's32[1]{0}', space=sflag, size = 0x4, scoped, tag = 'scoped memory for tpu_custom_call.1']
    #allocation5 [shape = 'u8[4096]{0}', space=vmem, size = 0x1000, scoped, tag = 'input window, operand 1, single buffered']
    #allocation6 [shape = 's32[1]{0}', space=sflag, size = 0x4, scoped, tag = 'scoped memory for tpu_custom_call.1']
    #allocation7 [shape = 'u8[65536]{0}', space=vmem, size = 0x10000, scoped, tag = 'input window, operand 2, single buffered']
    #allocation8 [shape = 'u8[65536]{0}', space=vmem, size = 0x10000, scoped, tag = 'input window, operand 3, single buffered']
    #allocation9 [shape = 's32[1]{0}', space=sflag, size = 0x4, scoped, tag = 'scoped memory for tpu_custom_call.1']
    #allocation10 [shape = 'u8[65536]{0}', space=vmem, size = 0x10000, scoped, tag = 'input window, operand 5, single buffered']
    #allocation11 [shape = 'u8[4096]{0}', space=vmem, size = 0x1000, scoped, tag = 'output window, operand 0, single buffered']
    %12 = vsyncpa [#allocation3], 0
    %13 = vsyncpa [#allocation6], 0
    %14 = vsyncpa [#allocation9], 0
    %15 = vsyncpa [#allocation4], 0
    // Predicated region
    $region2: #{tpu_custom_call.1} parent=1 // pred_check
      _
    $region3: #{tpu_custom_call.1} parent=1 // pred_check_branch
      %17 = sbr.rel (0) target = $region5
    $region4: #{tpu_custom_call.1} parent=1 // pred_region
      %s19 = ssub.s32 128, 128
      %20 = vsyncadd [#allocation3], %s19
      %s22 = sshll.u32 [#allocation2], 4
      %s23 = int_to_ptr.vmem [resolvable:$true] %s22
      %25 = dma.hbm_to_vmem [thread:$0]  %s0, 128, %s23, [#allocation3]
    $region5: #{tpu_custom_call.1} parent=1 // pred_fallthru
      _
    // Predicated region
    $region6: #{tpu_custom_call.1} parent=1 // pred_check
      _
    $region7: #{tpu_custom_call.1} parent=1 // pred_check_branch
      %27 = sbr.rel (0) target = $region9
    $region8: #{tpu_custom_call.1} parent=1 // pred_region
      %s29 = ssub.s32 128, 128
      %30 = vsyncadd [#allocation6], %s29
      %s32 = sshll.u32 [#allocation5], 4
      %s33 = int_to_ptr.vmem [resolvable:$true] %s32
      %35 = dma.hbm_to_vmem [thread:$0]  %s1, 128, %s33, [#allocation6]
    $region9: #{tpu_custom_call.1} parent=1 // pred_fallthru
      _
    // Predicated region
    $region10: #{tpu_custom_call.1} parent=1 // pred_check
      _
    $region11: #{tpu_custom_call.1} parent=1 // pred_check_branch
      %37 = sbr.rel (0) target = $region13
    $region12: #{tpu_custom_call.1} parent=1 // pred_region
      %s39 = ssub.s32 2048, 2048
      %40 = vsyncadd [#allocation6], %s39
      %s41 = sshll.u32 [#allocation7], 4
      %s42 = int_to_ptr.vmem [resolvable:$true] %s41
      %47 = dma.hbm_to_vmem [thread:$0]  %s2, 2048, %s42, [#allocation6], 128, 128, 8
    $region13: #{tpu_custom_call.1} parent=1 // pred_fallthru
      _
    // Predicated region
    $region14: #{tpu_custom_call.1} parent=1 // pred_check
      _
    $region15: #{tpu_custom_call.1} parent=1 // pred_check_branch
      %49 = sbr.rel (0) target = $region17
    $region16: #{tpu_custom_call.1} parent=1 // pred_region
      %s51 = ssub.s32 2048, 2048
      %52 = vsyncadd [#allocation9], %s51
      %s53 = sshll.u32 [#allocation8], 4
      %s54 = int_to_ptr.vmem [resolvable:$true] %s53
      %59 = dma.hbm_to_vmem [thread:$0]  %s3, 2048, %s54, [#allocation9], 128, 128, 8
    $region17: #{tpu_custom_call.1} parent=1 // pred_fallthru
      _
    // Predicated region
    $region18: #{tpu_custom_call.1} parent=1 // pred_check
      _
    $region19: #{tpu_custom_call.1} parent=1 // pred_check_branch
      %61 = sbr.rel (0) target = $region21
    $region20: #{tpu_custom_call.1} parent=1 // pred_region
      _
    $region21: #{tpu_custom_call.1} parent=1 // pred_fallthru
      _
    // Predicated region
    $region22: #{tpu_custom_call.1} parent=1 // pred_check
      _
    $region23: #{tpu_custom_call.1} parent=1 // pred_check_branch
      %63 = sbr.rel (0) target = $region25
    $region24: #{tpu_custom_call.1} parent=1 // pred_region
      %s65 = ssub.s32 2048, 2048
      %66 = vsyncadd [#allocation9], %s65
      %s67 = sshll.u32 [#allocation10], 4
      %s68 = int_to_ptr.vmem [resolvable:$true] %s67
      %73 = dma.hbm_to_vmem [thread:$0]  %s5, 2048, %s68, [#allocation9], 128, 128, 8
    $region25: #{tpu_custom_call.1} parent=1 // pred_fallthru
      _
    // Predicated region
    $region26: #{tpu_custom_call.1} parent=1 // pred_check
      _
    $region27: #{tpu_custom_call.1} parent=1 // pred_check_branch
      %75 = sbr.rel (0) target = $region29
    $region28: #{tpu_custom_call.1} parent=1 // pred_region
      _
    $region29: #{tpu_custom_call.1} parent=1 // pred_fallthru
      _
    // Predicated region
    $region30: #{tpu_custom_call.1} parent=1 // pred_check
      _
    $region31: #{tpu_custom_call.1} parent=1 // pred_check_branch
      %77 = sbr.rel (0) target = $region33
    $region32: #{tpu_custom_call.1} parent=1 // pred_region
      %78 = dma.done [#allocation3], 128
    $region33: #{tpu_custom_call.1} parent=1 // pred_fallthru
      _
    // Predicated region
    $region34: #{tpu_custom_call.1} parent=1 // pred_check
      _
    $region35: #{tpu_custom_call.1} parent=1 // pred_check_branch
      %80 = sbr.rel (0) target = $region37
    $region36: #{tpu_custom_call.1} parent=1 // pred_region
      %81 = dma.done [#allocation6], 128
    $region37: #{tpu_custom_call.1} parent=1 // pred_fallthru
      _
    // Predicated region
    $region38: #{tpu_custom_call.1} parent=1 // pred_check
      _
    $region39: #{tpu_custom_call.1} parent=1 // pred_check_branch
      %83 = sbr.rel (0) target = $region41
    $region40: #{tpu_custom_call.1} parent=1 // pred_region
      %84 = dma.done [#allocation6], 2048
    $region41: #{tpu_custom_call.1} parent=1 // pred_fallthru
      _
    // Predicated region
    $region42: #{tpu_custom_call.1} parent=1 // pred_check
      _
    $region43: #{tpu_custom_call.1} parent=1 // pred_check_branch
      %86 = sbr.rel (0) target = $region45
    $region44: #{tpu_custom_call.1} parent=1 // pred_region
      %87 = dma.done [#allocation9], 2048
    $region45: #{tpu_custom_call.1} parent=1 // pred_fallthru
      _
    // Predicated region
    $region46: #{tpu_custom_call.1} parent=1 // pred_check
      _
    $region47: #{tpu_custom_call.1} parent=1 // pred_check_branch
      %89 = sbr.rel (0) target = $region49
    $region48: #{tpu_custom_call.1} parent=1 // pred_region
      %90 = dma.done [#allocation9], 2048
    $region49: #{tpu_custom_call.1} parent=1 // pred_fallthru
      _
    %v91 = vld [vmem:[#allocation2] sm:$0xff]
    %v92 = vld [vmem:[#allocation7] sm:$0xff]
    %v93 = vld [vmem:[#allocation7 + $0x8] sm:$0xff]
    %v94 = vld [vmem:[#allocation7 + $0x10] sm:$0xff]
    %v95 = vld [vmem:[#allocation7 + $0x18] sm:$0xff]
    %v96 = vld [vmem:[#allocation7 + $0x20] sm:$0xff]
    %v97 = vld [vmem:[#allocation7 + $0x28] sm:$0xff]
    %v98 = vld [vmem:[#allocation7 + $0x30] sm:$0xff]
    %v99 = vld [vmem:[#allocation7 + $0x38] sm:$0xff]
    %v100 = vld [vmem:[#allocation7 + $0x40] sm:$0xff]
    %v101 = vld [vmem:[#allocation7 + $0x48] sm:$0xff]
    %v102 = vld [vmem:[#allocation7 + $0x50] sm:$0xff]
    %v103 = vld [vmem:[#allocation7 + $0x58] sm:$0xff]
    %v104 = vld [vmem:[#allocation7 + $0x60] sm:$0xff]
    %v105 = vld [vmem:[#allocation7 + $0x68] sm:$0xff]
    %v106 = vld [vmem:[#allocation7 + $0x70] sm:$0xff]
    %v107 = vld [vmem:[#allocation7 + $0x78] sm:$0xff]
    %v108 = vld [vmem:[#allocation5] sm:$0xff]
    %v109 = vld [vmem:[#allocation8] sm:$0xff]
    %v110 = vld [vmem:[#allocation8 + $0x8] sm:$0xff]
    %v111 = vld [vmem:[#allocation8 + $0x10] sm:$0xff]
    %v112 = vld [vmem:[#allocation8 + $0x18] sm:$0xff]
    %v113 = vld [vmem:[#allocation8 + $0x20] sm:$0xff]
    %v114 = vld [vmem:[#allocation8 + $0x28] sm:$0xff]
    %v115 = vld [vmem:[#allocation8 + $0x30] sm:$0xff]
    %v116 = vld [vmem:[#allocation8 + $0x38] sm:$0xff]
    %v117 = vld [vmem:[#allocation8 + $0x40] sm:$0xff]
    %v118 = vld [vmem:[#allocation8 + $0x48] sm:$0xff]
    %v119 = vld [vmem:[#allocation8 + $0x50] sm:$0xff]
    %v120 = vld [vmem:[#allocation8 + $0x58] sm:$0xff]
    %v121 = vld [vmem:[#allocation8 + $0x60] sm:$0xff]
    %v122 = vld [vmem:[#allocation8 + $0x68] sm:$0xff]
    %v123 = vld [vmem:[#allocation8 + $0x70] sm:$0xff]
    %v124 = vld [vmem:[#allocation8 + $0x78] sm:$0xff]
    %125 = vmatprep.subr.mxu0 0.0
    %126 = vmatpush1.msra.mxu0 %v109
    %127 = vmatprep.subr.mxu0 0.0
    %128 = vmatpush1.msra.mxu0 %v110
    %129 = vmatprep.subr.mxu0 0.0
    %130 = vmatpush1.msra.mxu0 %v111
    %131 = vmatprep.subr.mxu0 0.0
    %132 = vmatpush1.msra.mxu0 %v112
    %133 = vmatprep.subr.mxu0 0.0
    %134 = vmatpush1.msra.mxu0 %v113
    %135 = vmatprep.subr.mxu0 0.0
    %136 = vmatpush1.msra.mxu0 %v114
    %137 = vmatprep.subr.mxu0 0.0
    %138 = vmatpush1.msra.mxu0 %v115
    %139 = vmatprep.subr.mxu0 0.0
    %140 = vmatpush1.msra.mxu0 %v116
    %141 = vmatprep.subr.mxu0 0.0
    %142 = vmatpush1.msra.mxu0 %v117
    %143 = vmatprep.subr.mxu0 0.0
    %144 = vmatpush1.msra.mxu0 %v118
    %145 = vmatprep.subr.mxu0 0.0
    %146 = vmatpush1.msra.mxu0 %v119
    %147 = vmatprep.subr.mxu0 0.0
    %148 = vmatpush1.msra.mxu0 %v120
    %149 = vmatprep.subr.mxu0 0.0
    %150 = vmatpush1.msra.mxu0 %v121
    %151 = vmatprep.subr.mxu0 0.0
    %152 = vmatpush1.msra.mxu0 %v122
    %153 = vmatprep.subr.mxu0 0.0
    %154 = vmatpush1.msra.mxu0 %v123
    %155 = vmatprep.subr.mxu0 0.0
    %156 = vmatpush1.msra.mxu0 %v124
    %157 = vmatprep.subr.mxu0 0.0
    %158 = vmatpush1.msra.mxu0 0.0
    %159 = vmatprep.subr.mxu0 0.0
    %160 = vmatpush1.msra.mxu0 0.0
    %161 = vmatprep.subr.mxu0 0.0
    %162 = vmatpush1.msra.mxu0 0.0
    %163 = vmatprep.subr.mxu0 0.0
    %164 = vmatpush1.msra.mxu0 0.0
    %165 = vmatprep.subr.mxu0 0.0
    %166 = vmatpush1.msra.mxu0 0.0
    %167 = vmatprep.subr.mxu0 0.0
    %168 = vmatpush1.msra.mxu0 0.0
    %169 = vmatprep.subr.mxu0 0.0
    %170 = vmatpush1.msra.mxu0 0.0
    %171 = vmatprep.subr.mxu0 0.0
    %172 = vmatpush1.msra.mxu0 0.0
    %173 = vmatprep.subr.mxu0 0.0
    %174 = vmatpush1.msra.mxu0 0.0
    %175 = vmatprep.subr.mxu0 0.0
    %176 = vmatpush1.msra.mxu0 0.0
    %177 = vmatprep.subr.mxu0 0.0
    %178 = vmatpush1.msra.mxu0 0.0
    %179 = vmatprep.subr.mxu0 0.0
    %180 = vmatpush1.msra.mxu0 0.0
    %181 = vmatprep.subr.mxu0 0.0
    %182 = vmatpush1.msra.mxu0 0.0
    %183 = vmatprep.subr.mxu0 0.0
    %184 = vmatpush1.msra.mxu0 0.0
    %185 = vmatprep.subr.mxu0 0.0
    %186 = vmatpush1.msra.mxu0 0.0
    %187 = vmatprep.subr.mxu0 0.0
    %188 = vmatpush1.msra.mxu0 0.0
    %189 = vmatprep.mubr.f32.mxu0 0.0
    %190 = vmatmul.mubr.f32.gmra.mrb[0].mxu0 %v108
    %v191 = vpop.f32.mrb[0].mxu0
    %v192 = vadd.f32 0.0, %v191
    %v193 = vpop.f32.mrb[0].mxu0
    %194 = vdwg.mxu0
    %195 = vmatprep.subr.mxu0 0.0
    %196 = vmatpush1.msra.mxu0 %v92
    %197 = vmatprep.subr.mxu0 0.0
    %198 = vmatpush1.msra.mxu0 %v93
    %199 = vmatprep.subr.mxu0 0.0
    %200 = vmatpush1.msra.mxu0 %v94
    %201 = vmatprep.subr.mxu0 0.0
    %202 = vmatpush1.msra.mxu0 %v95
    %203 = vmatprep.subr.mxu0 0.0
    %204 = vmatpush1.msra.mxu0 %v96
    %205 = vmatprep.subr.mxu0 0.0
    %206 = vmatpush1.msra.mxu0 %v97
    %207 = vmatprep.subr.mxu0 0.0
    %208 = vmatpush1.msra.mxu0 %v98
    %209 = vmatprep.subr.mxu0 0.0
    %210 = vmatpush1.msra.mxu0 %v99
    %211 = vmatprep.subr.mxu0 0.0
    %212 = vmatpush1.msra.mxu0 %v100
    %213 = vmatprep.subr.mxu0 0.0
    %214 = vmatpush1.msra.mxu0 %v101
    %215 = vmatprep.subr.mxu0 0.0
    %216 = vmatpush1.msra.mxu0 %v102
    %217 = vmatprep.subr.mxu0 0.0
    %218 = vmatpush1.msra.mxu0 %v103
    %219 = vmatprep.subr.mxu0 0.0
    %220 = vmatpush1.msra.mxu0 %v104
    %221 = vmatprep.subr.mxu0 0.0
    %222 = vmatpush1.msra.mxu0 %v105
    %223 = vmatprep.subr.mxu0 0.0
    %224 = vmatpush1.msra.mxu0 %v106
    %225 = vmatprep.subr.mxu0 0.0
    %226 = vmatpush1.msra.mxu0 %v107
    %227 = vmatprep.subr.mxu0 0.0
    %228 = vmatpush1.msra.mxu0 0.0
    %229 = vmatprep.subr.mxu0 0.0
    %230 = vmatpush1.msra.mxu0 0.0
    %231 = vmatprep.subr.mxu0 0.0
    %232 = vmatpush1.msra.mxu0 0.0
    %233 = vmatprep.subr.mxu0 0.0
    %234 = vmatpush1.msra.mxu0 0.0
    %235 = vmatprep.subr.mxu0 0.0
    %236 = vmatpush1.msra.mxu0 0.0
    %237 = vmatprep.subr.mxu0 0.0
    %238 = vmatpush1.msra.mxu0 0.0
    %239 = vmatprep.subr.mxu0 0.0
    %240 = vmatpush1.msra.mxu0 0.0
    %241 = vmatprep.subr.mxu0 0.0
    %242 = vmatpush1.msra.mxu0 0.0
    %243 = vmatprep.subr.mxu0 0.0
    %244 = vmatpush1.msra.mxu0 0.0
    %245 = vmatprep.subr.mxu0 0.0
    %246 = vmatpush1.msra.mxu0 0.0
    %247 = vmatprep.subr.mxu0 0.0
    %248 = vmatpush1.msra.mxu0 0.0
    %249 = vmatprep.subr.mxu0 0.0
    %250 = vmatpush1.msra.mxu0 0.0
    %251 = vmatprep.subr.mxu0 0.0
    %252 = vmatpush1.msra.mxu0 0.0
    %253 = vmatprep.subr.mxu0 0.0
    %254 = vmatpush1.msra.mxu0 0.0
    %255 = vmatprep.subr.mxu0 0.0
    %256 = vmatpush1.msra.mxu0 0.0
    %257 = vmatprep.subr.mxu0 0.0
    %258 = vmatpush1.msra.mxu0 0.0
    %259 = vmatprep.mubr.f32.mxu0 0.0
    %260 = vmatmul.mubr.f32.gmra.mrb[0].mxu0 %v91
    %v261 = vpop.f32.mrb[0].mxu0
    %v262 = vadd.f32 %v192, %v261
    %v263 = vpop.f32.mrb[0].mxu0
    %264 = vdwg.mxu0
    %v265 = vld [vmem:[%s4] sm:$0x1]
    %v267 = vlaneseq
    %v268 = vshrl.u32 %v267, 7
    %v269 = vsub.s32 0, %v268
    %v270 = vrot.slane %v265, %v269
    %v272 = vadd.f32 %v262, %v270
    %v273 = vmax.f32 %v272, 0.0
    %v274 = vld [vmem:[#allocation10] sm:$0xff]
    %v275 = vld [vmem:[#allocation10 + $0x8] sm:$0xff]
    %v276 = vld [vmem:[#allocation10 + $0x10] sm:$0xff]
    %v277 = vld [vmem:[#allocation10 + $0x18] sm:$0xff]
    %v278 = vld [vmem:[#allocation10 + $0x20] sm:$0xff]
    %v279 = vld [vmem:[#allocation10 + $0x28] sm:$0xff]
    %v280 = vld [vmem:[#allocation10 + $0x30] sm:$0xff]
    %v281 = vld [vmem:[#allocation10 + $0x38] sm:$0xff]
    %v282 = vld [vmem:[#allocation10 + $0x40] sm:$0xff]
    %v283 = vld [vmem:[#allocation10 + $0x48] sm:$0xff]
    %v284 = vld [vmem:[#allocation10 + $0x50] sm:$0xff]
    %v285 = vld [vmem:[#allocation10 + $0x58] sm:$0xff]
    %v286 = vld [vmem:[#allocation10 + $0x60] sm:$0xff]
    %v287 = vld [vmem:[#allocation10 + $0x68] sm:$0xff]
    %v288 = vld [vmem:[#allocation10 + $0x70] sm:$0xff]
    %v289 = vld [vmem:[#allocation10 + $0x78] sm:$0xff]
    %v290 = vld [vmem:[%s6] sm:$0x1]
    %v292 = vlaneseq
    %v293 = vshrl.u32 %v292, 7
    %v294 = vsub.s32 0, %v293
    %v295 = vrot.slane %v290, %v294
    %297 = vmatprep.subr.mxu0 0.0
    %298 = vmatpush1.msra.mxu0 %v274
    %299 = vmatprep.subr.mxu0 0.0
    %300 = vmatpush1.msra.mxu0 %v275
    %301 = vmatprep.subr.mxu0 0.0
    %302 = vmatpush1.msra.mxu0 %v276
    %303 = vmatprep.subr.mxu0 0.0
    %304 = vmatpush1.msra.mxu0 %v277
    %305 = vmatprep.subr.mxu0 0.0
    %306 = vmatpush1.msra.mxu0 %v278
    %307 = vmatprep.subr.mxu0 0.0
    %308 = vmatpush1.msra.mxu0 %v279
    %309 = vmatprep.subr.mxu0 0.0
    %310 = vmatpush1.msra.mxu0 %v280
    %311 = vmatprep.subr.mxu0 0.0
    %312 = vmatpush1.msra.mxu0 %v281
    %313 = vmatprep.subr.mxu0 0.0
    %314 = vmatpush1.msra.mxu0 %v282
    %315 = vmatprep.subr.mxu0 0.0
    %316 = vmatpush1.msra.mxu0 %v283
    %317 = vmatprep.subr.mxu0 0.0
    %318 = vmatpush1.msra.mxu0 %v284
    %319 = vmatprep.subr.mxu0 0.0
    %320 = vmatpush1.msra.mxu0 %v285
    %321 = vmatprep.subr.mxu0 0.0
    %322 = vmatpush1.msra.mxu0 %v286
    %323 = vmatprep.subr.mxu0 0.0
    %324 = vmatpush1.msra.mxu0 %v287
    %325 = vmatprep.subr.mxu0 0.0
    %326 = vmatpush1.msra.mxu0 %v288
    %327 = vmatprep.subr.mxu0 0.0
    %328 = vmatpush1.msra.mxu0 %v289
    %329 = vmatprep.subr.mxu0 0.0
    %330 = vmatpush1.msra.mxu0 0.0
    %331 = vmatprep.subr.mxu0 0.0
    %332 = vmatpush1.msra.mxu0 0.0
    %333 = vmatprep.subr.mxu0 0.0
    %334 = vmatpush1.msra.mxu0 0.0
    %335 = vmatprep.subr.mxu0 0.0
    %336 = vmatpush1.msra.mxu0 0.0
    %337 = vmatprep.subr.mxu0 0.0
    %338 = vmatpush1.msra.mxu0 0.0
    %339 = vmatprep.subr.mxu0 0.0
    %340 = vmatpush1.msra.mxu0 0.0
    %341 = vmatprep.subr.mxu0 0.0
    %342 = vmatpush1.msra.mxu0 0.0
    %343 = vmatprep.subr.mxu0 0.0
    %344 = vmatpush1.msra.mxu0 0.0
    %345 = vmatprep.subr.mxu0 0.0
    %346 = vmatpush1.msra.mxu0 0.0
    %347 = vmatprep.subr.mxu0 0.0
    %348 = vmatpush1.msra.mxu0 0.0
    %349 = vmatprep.subr.mxu0 0.0
    %350 = vmatpush1.msra.mxu0 0.0
    %351 = vmatprep.subr.mxu0 0.0
    %352 = vmatpush1.msra.mxu0 0.0
    %353 = vmatprep.subr.mxu0 0.0
    %354 = vmatpush1.msra.mxu0 0.0
    %355 = vmatprep.subr.mxu0 0.0
    %356 = vmatpush1.msra.mxu0 0.0
    %357 = vmatprep.subr.mxu0 0.0
    %358 = vmatpush1.msra.mxu0 0.0
    %359 = vmatprep.subr.mxu0 0.0
    %360 = vmatpush1.msra.mxu0 0.0
    %361 = vmatprep.mubr.f32.mxu0 0.0
    %362 = vmatmul.mubr.f32.gmra.mrb[0].mxu0 %v273
    %v363 = vpop.f32.mrb[0].mxu0
    %v364 = vadd.f32 %v295, %v363
    %v365 = vpop.f32.mrb[0].mxu0
    %366 = vdwg.mxu0
    %367 = vst [vmem:[#allocation11] sm:$0xff] %v364
    // Predicated region
    $region50: #{tpu_custom_call.1} parent=1 // pred_check
      _
    $region51: #{tpu_custom_call.1} parent=1 // pred_check_branch
      %369 = sbr.rel (0) target = $region53
    $region52: #{tpu_custom_call.1} parent=1 // pred_region
      %s371 = ssub.s32 128, 128
      %372 = vsyncadd [#allocation4], %s371
      %s374 = sshll.u32 [#allocation11], 4
      %s375 = int_to_ptr.vmem [resolvable:$true] %s374
      %377 = dma.vmem_to_hbm [thread:$0]  %s375, 128, %s7, [#allocation4]
    $region53: #{tpu_custom_call.1} parent=1 // pred_fallthru
      _
    // Predicated region
    $region54: #{tpu_custom_call.1} parent=1 // pred_check
      _
    $region55: #{tpu_custom_call.1} parent=1 // pred_check_branch
      %379 = sbr.rel (0) target = $region57
    $region56: #{tpu_custom_call.1} parent=1 // pred_region
      %380 = dma.done [#allocation4], 128
    $region57: #{tpu_custom_call.1} parent=1 // pred_fallthru
      _
    %381 = vsyncpa [#allocation3], 1
    %382 = vsyncpa [#allocation6], 1
    %383 = vsyncpa [#allocation9], 1
    %384 = vsyncpa [#allocation4], 1

</llo_original>
